<compile_context>
chip_gen: v7x
topology: tpu7x:2x2x1
jax: 0.10.0
libtpu: 0.0.40
codegen_flags: <defaults>
</compile_context>

<pallas_src>
import functools
from typing import List

import jax
import jax.numpy as jnp
from jax.experimental import pallas as pl
from jax.experimental.pallas import tpu as pltpu


def round_up(n: int, m: int) -> int:
    return ((n + m - 1) // m) * m


# ----------------------------- Pallas kernel ---------------------------------

def _fused_mlp_kernel(*refs, n_layers: int):
    """Fused MLP over one batch tile.

    refs = (x_ref, w1_ref, b1_ref, ..., wL_ref, bL_ref, o_ref).
    Weights are bf16, biases f32. Matmuls accumulate in f32 on the MXU,
    bias-add / ReLU run in f32 on the VPU. Intermediates stay on-chip.
    """
    x_ref = refs[0]
    o_ref = refs[-1]
    h = x_ref[...]
    for i in range(n_layers):
        w_ref = refs[1 + 2 * i]
        b_ref = refs[2 + 2 * i]
        h = jnp.dot(h.astype(w_ref.dtype), w_ref[...],
                    preferred_element_type=jnp.float32)
        h = h + b_ref[...]                      # (tile_b, N) + (1, N) broadcast, f32
        if i < n_layers - 1:
            h = jnp.maximum(h, 0.0)
    o_ref[...] = h.astype(o_ref.dtype)


def fused_mlp_pallas(x_p: jax.Array, prepared_params, b_tile: int) -> jax.Array:
    """x_p: (B_pad, K_pad); prepared_params: [(W_pad, b_pad), ...] -> (B_pad, N_pad) f32."""
    Bp, Kp = x_p.shape
    n_layers = len(prepared_params)
    Np = prepared_params[-1][0].shape[1]

    flat_wb = []
    in_specs = [pl.BlockSpec((b_tile, Kp), lambda i: (i, 0))]
    for w, b in prepared_params:
        flat_wb.append(w)
        flat_wb.append(b)
        # Whole-array weight/bias blocks; constant block index -> fetched once,
        # resident in VMEM across all batch tiles.
        in_specs.append(pl.BlockSpec(w.shape, lambda i: (0, 0)))
        in_specs.append(pl.BlockSpec(b.shape, lambda i: (0, 0)))

    kernel = functools.partial(_fused_mlp_kernel, n_layers=n_layers)
    return pl.pallas_call(
        kernel,
        out_shape=jax.ShapeDtypeStruct((Bp, Np), jnp.float32),
        grid=(Bp // b_tile,),
        in_specs=in_specs,
        out_specs=pl.BlockSpec((b_tile, Np), lambda i: (i, 0)),
        compiler_params=pltpu.CompilerParams(
            dimension_semantics=("parallel",),   # shards batch tiles across TCs on v7x
        ),
    )(x_p, *flat_wb)


# ----------------------------- Param setup ------------------------------------

def init_mnist_ann_params(key, input_size: int, hidden_layer_sizes: List[int],
                          output_size: int, dtype=jnp.float32):
    """Deterministic synthetic init matching the nn.Linear shapes of MNISTANN
    (weights stored transposed: (in, out); bias: (1, out))."""
    layer_sizes = [input_size] + list(hidden_layer_sizes) + [output_size]
    params = []
    for i in range(len(layer_sizes) - 1):
        fan_in, fan_out = layer_sizes[i], layer_sizes[i + 1]
        key, kw, kb = jax.random.split(key, 3)
        bound = 1.0 / jnp.sqrt(fan_in)  # PyTorch default uniform(-1/sqrt(fan_in), +...)
        w = jax.random.uniform(kw, (fan_in, fan_out), dtype, -bound, bound)
        b = jax.random.uniform(kb, (1, fan_out), dtype, -bound, bound)
        params.append((w, b))
    return params


def prepare_params(params, compute_dtype=jnp.bfloat16):
    """Zero-pad every layer to lane-dense (multiple-of-128) feature dims and cast
    weights to the MXU compute dtype. Biases stay f32 for the f32 epilogue.
    Done once at setup; mathematically a no-op (padded rows/cols are zero)."""
    prepared = []
    for w, b in params:
        k, n = w.shape
        kp, np_ = round_up(k, 128), round_up(n, 128)
        wp = jnp.zeros((kp, np_), compute_dtype).at[:k, :n].set(w.astype(compute_dtype))
        bp = jnp.zeros((1, np_), jnp.float32).at[:, :n].set(b.astype(jnp.float32))
        prepared.append((wp, bp))
    return prepared


# ----------------------------- Forward pass ------------------------------------

def mnist_ann_forward(x: jax.Array, prepared_params, output_size: int,
                      compute_dtype=jnp.bfloat16, max_batch_tile: int = 1024) -> jax.Array:
    """x.view(-1, 784) -> fused [Linear/ReLU]* + Linear, then slice back to (B, out)."""
    h = x.reshape(-1, 28 * 28)
    B, K = h.shape
    Kp = prepared_params[0][0].shape[0]

    # Pad batch to a full sublane group / batch tile (tile capped for v7x VMEM).
    b_tile = min(max_batch_tile, round_up(B, 8))
    Bp = round_up(B, b_tile)
    h_p = jnp.zeros((Bp, Kp), compute_dtype).at[:B, :K].set(h.astype(compute_dtype))

    out_p = fused_mlp_pallas(h_p, prepared_params, b_tile)
    return out_p[:B, :output_size]


# Pure-JAX reference that mirrors the kernel's quantization (bf16 inputs to each
# matmul, f32 accumulation/epilogue) for a tight correctness check.
def _mnist_ann_ref(x, params, compute_dtype=jnp.bfloat16):
    h = x.reshape(-1, 28 * 28)
    n_layers = len(params)
    for i, (w, b) in enumerate(params):
        h = jnp.dot(h.astype(compute_dtype), w.astype(compute_dtype),
                    preferred_element_type=jnp.float32)
        h = h + b.astype(jnp.float32)
        if i < n_layers - 1:
            h = jnp.maximum(h, 0.0)
    return h


# --------------------------------- Main ----------------------------------------

if __name__ == "__main__":
    key = jax.random.PRNGKey(0)
    key, kx = jax.random.split(key)

    # MNIST-like setup: batch=2, NCHW images (2, 1, 28, 28); hidden=[128, 64]; 10 classes.
    input_size = 28 * 28
    hidden_layer_sizes = [128, 64]
    output_size = 10

    x = jax.random.normal(kx, (2, 1, 28, 28), dtype=jnp.float32)
    params = init_mnist_ann_params(key, input_size, hidden_layer_sizes, output_size)
    prepared = prepare_params(params, compute_dtype=jnp.bfloat16)

    fwd = jax.jit(functools.partial(mnist_ann_forward, output_size=output_size))
    out = fwd(x, prepared)
    out = jax.block_until_ready(out)

    ref = _mnist_ann_ref(x, params, compute_dtype=jnp.bfloat16)
    assert out.shape == (2, output_size), out.shape
    assert jnp.allclose(out, ref.astype(out.dtype), atol=1e-3, rtol=1e-3), \
        "mismatch vs reference"

    print("KERNEL_OK")
</pallas_src>

<mosaic_0001>
module attributes {stable_mosaic.version = 11 : i64} {
  func.func @_fused_mlp_kernel(%arg0: i32, %arg1: memref<8x896xbf16, #tpu.memory_space<vmem>>, %arg2: memref<896x128xbf16, #tpu.memory_space<vmem>>, %arg3: memref<1x128xf32, #tpu.memory_space<vmem>>, %arg4: memref<128x128xbf16, #tpu.memory_space<vmem>>, %arg5: memref<1x128xf32, #tpu.memory_space<vmem>>, %arg6: memref<128x128xbf16, #tpu.memory_space<vmem>>, %arg7: memref<1x128xf32, #tpu.memory_space<vmem>>, %arg8: memref<8x128xf32, #tpu.memory_space<vmem>>) attributes {dimension_semantics = [#tpu.dimension_semantics<parallel>], iteration_bounds = array<i64: 1>, scalar_prefetch = 0 : i64, scratch_operands = 0 : i64, tpu.core_type = #tpu.core_type<tc>, window_params = [{transform_indices = @transform_0, window_bounds = array<i64: 8, 896>}, {pipeline_mode = #tpu.pipeline_mode<synchronous>, transform_indices = @transform_1, window_bounds = array<i64: 896, 128>}, {pipeline_mode = #tpu.pipeline_mode<synchronous>, transform_indices = @transform_2, window_bounds = array<i64: 1, 128>}, {pipeline_mode = #tpu.pipeline_mode<synchronous>, transform_indices = @transform_3, window_bounds = array<i64: 128, 128>}, {pipeline_mode = #tpu.pipeline_mode<synchronous>, transform_indices = @transform_4, window_bounds = array<i64: 1, 128>}, {pipeline_mode = #tpu.pipeline_mode<synchronous>, transform_indices = @transform_5, window_bounds = array<i64: 128, 128>}, {pipeline_mode = #tpu.pipeline_mode<synchronous>, transform_indices = @transform_6, window_bounds = array<i64: 1, 128>}, {transform_indices = @transform_7, window_bounds = array<i64: 8, 128>}]} {
    %c0 = arith.constant 0 : index
    %c0_0 = arith.constant 0 : index
    %0 = vector.load %arg1[%c0, %c0_0] : memref<8x896xbf16, #tpu.memory_space<vmem>>, vector<8x896xbf16>
    %c0_1 = arith.constant 0 : index
    %c0_2 = arith.constant 0 : index
    %1 = vector.load %arg2[%c0_1, %c0_2] : memref<896x128xbf16, #tpu.memory_space<vmem>>, vector<896x128xbf16>
    %cst = arith.constant dense<0.000000e+00> : vector<8x128xf32>
    %2 = tpu.matmul %0, %1, %cst {dimension_numbers = #tpu.dot_dimension_numbers<[1], [0], [0], [1], [0, 0, 1, 1], [], []>} : vector<8x896xbf16>, vector<896x128xbf16>, vector<8x128xf32> -> vector<8x128xf32>
    %c0_3 = arith.constant 0 : index
    %c0_4 = arith.constant 0 : index
    %3 = vector.load %arg3[%c0_3, %c0_4] : memref<1x128xf32, #tpu.memory_space<vmem>>, vector<1x128xf32>
    %4 = vector.broadcast %3 : vector<1x128xf32> to vector<8x128xf32>
    %5 = arith.addf %2, %4 : vector<8x128xf32>
    %cst_5 = arith.constant 0.000000e+00 : f32
    %6 = vector.broadcast %cst_5 : f32 to vector<8x128xf32>
    %7 = arith.maximumf %5, %6 : vector<8x128xf32>
    %8 = arith.truncf %7 : vector<8x128xf32> to vector<8x128xbf16>
    %c0_6 = arith.constant 0 : index
    %c0_7 = arith.constant 0 : index
    %9 = vector.load %arg4[%c0_6, %c0_7] : memref<128x128xbf16, #tpu.memory_space<vmem>>, vector<128x128xbf16>
    %cst_8 = arith.constant dense<0.000000e+00> : vector<8x128xf32>
    %10 = tpu.matmul %8, %9, %cst_8 {dimension_numbers = #tpu.dot_dimension_numbers<[1], [0], [0], [1], [0, 0, 1, 1], [], []>} : vector<8x128xbf16>, vector<128x128xbf16>, vector<8x128xf32> -> vector<8x128xf32>
    %c0_9 = arith.constant 0 : index
    %c0_10 = arith.constant 0 : index
    %11 = vector.load %arg5[%c0_9, %c0_10] : memref<1x128xf32, #tpu.memory_space<vmem>>, vector<1x128xf32>
    %12 = vector.broadcast %11 : vector<1x128xf32> to vector<8x128xf32>
    %13 = arith.addf %10, %12 : vector<8x128xf32>
    %cst_11 = arith.constant 0.000000e+00 : f32
    %14 = vector.broadcast %cst_11 : f32 to vector<8x128xf32>
    %15 = arith.maximumf %13, %14 : vector<8x128xf32>
    %16 = arith.truncf %15 : vector<8x128xf32> to vector<8x128xbf16>
    %c0_12 = arith.constant 0 : index
    %c0_13 = arith.constant 0 : index
    %17 = vector.load %arg6[%c0_12, %c0_13] : memref<128x128xbf16, #tpu.memory_space<vmem>>, vector<128x128xbf16>
    %cst_14 = arith.constant dense<0.000000e+00> : vector<8x128xf32>
    %18 = tpu.matmul %16, %17, %cst_14 {dimension_numbers = #tpu.dot_dimension_numbers<[1], [0], [0], [1], [0, 0, 1, 1], [], []>} : vector<8x128xbf16>, vector<128x128xbf16>, vector<8x128xf32> -> vector<8x128xf32>
    %c0_15 = arith.constant 0 : index
    %c0_16 = arith.constant 0 : index
    %19 = vector.load %arg7[%c0_15, %c0_16] : memref<1x128xf32, #tpu.memory_space<vmem>>, vector<1x128xf32>
    %20 = vector.broadcast %19 : vector<1x128xf32> to vector<8x128xf32>
    %21 = arith.addf %18, %20 : vector<8x128xf32>
    %c0_17 = arith.constant 0 : index
    %c0_18 = arith.constant 0 : index
    %22 = vector.load %arg8[%c0_17, %c0_18] : memref<8x128xf32, #tpu.memory_space<vmem>>, vector<8x128xf32>
    tpu.vector_store %arg8[%c0_17, %c0_18], %21 {strides = array<i32>} : memref<8x128xf32, #tpu.memory_space<vmem>>, vector<8x128xf32>,
    return
  }
  func.func @transform_0(%arg0: i32) -> (i32, i32) {
    %c0_i32 = arith.constant 0 : i32
    %c0_i32_0 = arith.constant 0 : i32
    return %arg0, %c0_i32 : i32, i32
  }
  func.func @transform_1(%arg0: i32) -> (i32, i32) {
    %c0_i32 = arith.constant 0 : i32
    %c0_i32_0 = arith.constant 0 : i32
    %c0_i32_1 = arith.constant 0 : i32
    return %c0_i32, %c0_i32_0 : i32, i32
  }
  func.func @transform_2(%arg0: i32) -> (i32, i32) {
    %c0_i32 = arith.constant 0 : i32
    %c0_i32_0 = arith.constant 0 : i32
    %c0_i32_1 = arith.constant 0 : i32
    return %c0_i32, %c0_i32_0 : i32, i32
  }
  func.func @transform_3(%arg0: i32) -> (i32, i32) {
    %c0_i32 = arith.constant 0 : i32
    %c0_i32_0 = arith.constant 0 : i32
    %c0_i32_1 = arith.constant 0 : i32
    return %c0_i32, %c0_i32_0 : i32, i32
  }
  func.func @transform_4(%arg0: i32) -> (i32, i32) {
    %c0_i32 = arith.constant 0 : i32
    %c0_i32_0 = arith.constant 0 : i32
    %c0_i32_1 = arith.constant 0 : i32
    return %c0_i32, %c0_i32_0 : i32, i32
  }
  func.func @transform_5(%arg0: i32) -> (i32, i32) {
    %c0_i32 = arith.constant 0 : i32
    %c0_i32_0 = arith.constant 0 : i32
    %c0_i32_1 = arith.constant 0 : i32
    return %c0_i32, %c0_i32_0 : i32, i32
  }
  func.func @transform_6(%arg0: i32) -> (i32, i32) {
    %c0_i32 = arith.constant 0 : i32
    %c0_i32_0 = arith.constant 0 : i32
    %c0_i32_1 = arith.constant 0 : i32
    return %c0_i32, %c0_i32_0 : i32, i32
  }
  func.func @transform_7(%arg0: i32) -> (i32, i32) {
    %c0_i32 = arith.constant 0 : i32
    %c0_i32_0 = arith.constant 0 : i32
    return %arg0, %c0_i32 : i32, i32
  }
}

</mosaic_0001>

<llo_original>
// kernel: mnist_ann_forward.1
$region0: #{mnist_ann_forward.1}
  #allocation0 [shape = 'u32[]', space=smem, size = 0x4, offset = 0x4, fixed_abs, tag = 'smem constant byte address 0x4 - core index']
  #allocation1 [shape = 'u32[144,128]{1,0:T(1,128)}', space=vmem, size = 0x12000, scoped, tag = 'internal scratch']
  %s0 = inlined_call_operand.vmem [shape: bf16[8,896], index: 0, kind: input, shape index: {}]
  %s1 = inlined_call_operand.hbm [shape: bf16[896,128], index: 1, kind: input, shape index: {}]
  %s2 = inlined_call_operand.vmem [shape: f32[1,128], index: 2, kind: input, shape index: {}]
  %s3 = inlined_call_operand.vmem [shape: bf16[128,128], index: 3, kind: input, shape index: {}]
  %s4 = inlined_call_operand.vmem [shape: f32[1,128], index: 4, kind: input, shape index: {}]
  %s5 = inlined_call_operand.vmem [shape: bf16[128,128], index: 5, kind: input, shape index: {}]
  %s6 = inlined_call_operand.vmem [shape: f32[1,128], index: 6, kind: input, shape index: {}]
  %s7 = inlined_call_operand.vmem [shape: f32[8,128], index: 7, kind: output, shape index: {}]
  %s8 = sld [smem:[#allocation0]]
  $region42: #{mnist_ann_forward.1} parent=0
    _
  %s10 = ssub.s32 1, %s8
  %s11 = scalar_select 0, %s10, %s8
  $region1: #{mnist_ann_forward.1} parent=0
    #allocation2 [shape = 'u8[229376]{0}', space=vmem, size = 0x38000, scoped, tag = 'input window, operand 1, single buffered']
    #allocation3 [shape = 's32[1]{0}', space=sflag, size = 0x4, scoped, tag = 'scoped memory for mnist_ann_forward.1']
    %12 = vsyncpa [#allocation3], 0
    // Predicated region
    $region2: #{mnist_ann_forward.1} parent=1 // pred_check
      _
    $region3: #{mnist_ann_forward.1} parent=1 // pred_check_branch
      %14 = sbr.rel (0) target = $region5
    $region4: #{mnist_ann_forward.1} parent=1 // pred_region
      _
    $region5: #{mnist_ann_forward.1} parent=1 // pred_fallthru
      _
    // Predicated region
    $region6: #{mnist_ann_forward.1} parent=1 // pred_check
      _
    $region7: #{mnist_ann_forward.1} parent=1 // pred_check_branch
      %16 = sbr.rel (0) target = $region9
    $region8: #{mnist_ann_forward.1} parent=1 // pred_region
      %s18 = ssub.s32 7168, 7168
      %19 = vsyncadd [#allocation3], %s18
      %s20 = sshll.u32 [#allocation2], 4
      %s21 = int_to_ptr.vmem [resolvable:$true] %s20
      %26 = dma.hbm_to_vmem [thread:$0]  %s1, 7168, %s21, [#allocation3], 64, 64, 4
    $region9: #{mnist_ann_forward.1} parent=1 // pred_fallthru
      _
    // Predicated region
    $region10: #{mnist_ann_forward.1} parent=1 // pred_check
      _
    $region11: #{mnist_ann_forward.1} parent=1 // pred_check_branch
      %28 = sbr.rel (0) target = $region13
    $region12: #{mnist_ann_forward.1} parent=1 // pred_region
      _
    $region13: #{mnist_ann_forward.1} parent=1 // pred_fallthru
      _
    // Predicated region
    $region14: #{mnist_ann_forward.1} parent=1 // pred_check
      _
    $region15: #{mnist_ann_forward.1} parent=1 // pred_check_branch
      %30 = sbr.rel (0) target = $region17
    $region16: #{mnist_ann_forward.1} parent=1 // pred_region
      _
    $region17: #{mnist_ann_forward.1} parent=1 // pred_fallthru
      _
    // Predicated region
    $region18: #{mnist_ann_forward.1} parent=1 // pred_check
      _
    $region19: #{mnist_ann_forward.1} parent=1 // pred_check_branch
      %32 = sbr.rel (0) target = $region21
    $region20: #{mnist_ann_forward.1} parent=1 // pred_region
      _
    $region21: #{mnist_ann_forward.1} parent=1 // pred_fallthru
      _
    // Predicated region
    $region22: #{mnist_ann_forward.1} parent=1 // pred_check
      _
    $region23: #{mnist_ann_forward.1} parent=1 // pred_check_branch
      %34 = sbr.rel (0) target = $region25
    $region24: #{mnist_ann_forward.1} parent=1 // pred_region
      _
    $region25: #{mnist_ann_forward.1} parent=1 // pred_fallthru
      _
    // Predicated region
    $region26: #{mnist_ann_forward.1} parent=1 // pred_check
      _
    $region27: #{mnist_ann_forward.1} parent=1 // pred_check_branch
      %36 = sbr.rel (0) target = $region29
    $region28: #{mnist_ann_forward.1} parent=1 // pred_region
      _
    $region29: #{mnist_ann_forward.1} parent=1 // pred_fallthru
      _
    // Predicated region
    $region30: #{mnist_ann_forward.1} parent=1 // pred_check
      _
    $region31: #{mnist_ann_forward.1} parent=1 // pred_check_branch
      %38 = sbr.rel (0) target = $region33
    $region32: #{mnist_ann_forward.1} parent=1 // pred_region
      %39 = dma.done [#allocation3], 7168
    $region33: #{mnist_ann_forward.1} parent=1 // pred_fallthru
      _
    %v41 = vld [vmem:[%s0] sm:$0xff]
    %v42 = vld [vmem:[%s0 + $0x8] sm:$0xff]
    %v43 = vld [vmem:[%s0 + $0x10] sm:$0xff]
    %v44 = vld [vmem:[%s0 + $0x18] sm:$0xf]
    %v45 = vld [vmem:[#allocation2] sm:$0xf]
    %v46 = vld [vmem:[#allocation2 + $0x4] sm:$0xf]
    %v47 = vld [vmem:[#allocation2 + $0x8] sm:$0xf]
    %v48 = vld [vmem:[#allocation2 + $0xc] sm:$0xf]
    %v49 = vld [vmem:[#allocation2 + $0x10] sm:$0xf]
    %v50 = vld [vmem:[#allocation2 + $0x14] sm:$0xf]
    %v51 = vld [vmem:[#allocation2 + $0x18] sm:$0xf]
    %v52 = vld [vmem:[#allocation2 + $0x1c] sm:$0xf]
    %v53 = vld [vmem:[#allocation2 + $0x20] sm:$0xf]
    %v54 = vld [vmem:[#allocation2 + $0x24] sm:$0xf]
    %v55 = vld [vmem:[#allocation2 + $0x28] sm:$0xf]
    %v56 = vld [vmem:[#allocation2 + $0x2c] sm:$0xf]
    %v57 = vld [vmem:[#allocation2 + $0x30] sm:$0xf]
    %v58 = vld [vmem:[#allocation2 + $0x34] sm:$0xf]
    %v59 = vld [vmem:[#allocation2 + $0x38] sm:$0xf]
    %v60 = vld [vmem:[#allocation2 + $0x3c] sm:$0xf]
    %v61 = vld [vmem:[#allocation2 + $0x40] sm:$0xf]
    %v62 = vld [vmem:[#allocation2 + $0x44] sm:$0xf]
    %v63 = vld [vmem:[#allocation2 + $0x48] sm:$0xf]
    %v64 = vld [vmem:[#allocation2 + $0x4c] sm:$0xf]
    %v65 = vld [vmem:[#allocation2 + $0x50] sm:$0xf]
    %v66 = vld [vmem:[#allocation2 + $0x54] sm:$0xf]
    %v67 = vld [vmem:[#allocation2 + $0x58] sm:$0xf]
    %v68 = vld [vmem:[#allocation2 + $0x5c] sm:$0xf]
    %v69 = vld [vmem:[#allocation2 + $0x60] sm:$0xf]
    %v70 = vld [vmem:[#allocation2 + $0x64] sm:$0xf]
    %v71 = vld [vmem:[#allocation2 + $0x68] sm:$0xf]
    %v72 = vld [vmem:[#allocation2 + $0x6c] sm:$0xf]
    %v73 = vld [vmem:[#allocation2 + $0x70] sm:$0xf]
    %v74 = vld [vmem:[#allocation2 + $0x74] sm:$0xf]
    %v75 = vld [vmem:[#allocation2 + $0x78] sm:$0xf]
    %v76 = vld [vmem:[#allocation2 + $0x7c] sm:$0xf]
    %v77 = vld [vmem:[#allocation2 + $0x80] sm:$0xf]
    %v78 = vld [vmem:[#allocation2 + $0x84] sm:$0xf]
    %v79 = vld [vmem:[#allocation2 + $0x88] sm:$0xf]
    %v80 = vld [vmem:[#allocation2 + $0x8c] sm:$0xf]
    %v81 = vld [vmem:[#allocation2 + $0x90] sm:$0xf]
    %v82 = vld [vmem:[#allocation2 + $0x94] sm:$0xf]
    %v83 = vld [vmem:[#allocation2 + $0x98] sm:$0xf]
    %v84 = vld [vmem:[#allocation2 + $0x9c] sm:$0xf]
    %v85 = vld [vmem:[#allocation2 + $0xa0] sm:$0xf]
    %v86 = vld [vmem:[#allocation2 + $0xa4] sm:$0xf]
    %v87 = vld [vmem:[#allocation2 + $0xa8] sm:$0xf]
    %v88 = vld [vmem:[#allocation2 + $0xac] sm:$0xf]
    %v89 = vld [vmem:[#allocation2 + $0xb0] sm:$0xf]
    %v90 = vld [vmem:[#allocation2 + $0xb4] sm:$0xf]
    %v91 = vld [vmem:[#allocation2 + $0xb8] sm:$0xf]
    %v92 = vld [vmem:[#allocation2 + $0xbc] sm:$0xf]
    %v93 = vld [vmem:[#allocation2 + $0xc0] sm:$0xf]
    %v94 = vld [vmem:[#allocation2 + $0xc4] sm:$0xf]
    %v95 = vld [vmem:[#allocation2 + $0xc8] sm:$0xf]
    %v96 = vld [vmem:[#allocation2 + $0xcc] sm:$0xf]
    %v97 = vld [vmem:[#allocation2 + $0xd0] sm:$0xf]
    %v98 = vld [vmem:[#allocation2 + $0xd4] sm:$0xf]
    %v99 = vld [vmem:[#allocation2 + $0xd8] sm:$0xf]
    %v100 = vld [vmem:[#allocation2 + $0xdc] sm:$0xf]
    %v101 = vld [vmem:[#allocation2 + $0xe0] sm:$0xf]
    %v102 = vld [vmem:[#allocation2 + $0xe4] sm:$0xf]
    %v103 = vld [vmem:[#allocation2 + $0xe8] sm:$0xf]
    %v104 = vld [vmem:[#allocation2 + $0xec] sm:$0xf]
    %v105 = vld [vmem:[#allocation2 + $0xf0] sm:$0xf]
    %v106 = vld [vmem:[#allocation2 + $0xf4] sm:$0xf]
    %v107 = vld [vmem:[#allocation2 + $0xf8] sm:$0xf]
    %v108 = vld [vmem:[#allocation2 + $0xfc] sm:$0xf]
    %v109 = vld [vmem:[#allocation2 + $0x100] sm:$0xf]
    %v110 = vld [vmem:[#allocation2 + $0x104] sm:$0xf]
    %v111 = vld [vmem:[#allocation2 + $0x108] sm:$0xf]
    %v112 = vld [vmem:[#allocation2 + $0x10c] sm:$0xf]
    %v113 = vld [vmem:[#allocation2 + $0x110] sm:$0xf]
    %v114 = vld [vmem:[#allocation2 + $0x114] sm:$0xf]
    %v115 = vld [vmem:[#allocation2 + $0x118] sm:$0xf]
    %v116 = vld [vmem:[#allocation2 + $0x11c] sm:$0xf]
    %v117 = vld [vmem:[#allocation2 + $0x120] sm:$0xf]
    %v118 = vld [vmem:[#allocation2 + $0x124] sm:$0xf]
    %v119 = vld [vmem:[#allocation2 + $0x128] sm:$0xf]
    %v120 = vld [vmem:[#allocation2 + $0x12c] sm:$0xf]
    %v121 = vld [vmem:[#allocation2 + $0x130] sm:$0xf]
    %v122 = vld [vmem:[#allocation2 + $0x134] sm:$0xf]
    %v123 = vld [vmem:[#allocation2 + $0x138] sm:$0xf]
    %v124 = vld [vmem:[#allocation2 + $0x13c] sm:$0xf]
    %v125 = vld [vmem:[#allocation2 + $0x140] sm:$0xf]
    %v126 = vld [vmem:[#allocation2 + $0x144] sm:$0xf]
    %v127 = vld [vmem:[#allocation2 + $0x148] sm:$0xf]
    %v128 = vld [vmem:[#allocation2 + $0x14c] sm:$0xf]
    %v129 = vld [vmem:[#allocation2 + $0x150] sm:$0xf]
    %v130 = vld [vmem:[#allocation2 + $0x154] sm:$0xf]
    %v131 = vld [vmem:[#allocation2 + $0x158] sm:$0xf]
    %v132 = vld [vmem:[#allocation2 + $0x15c] sm:$0xf]
    %v133 = vld [vmem:[#allocation2 + $0x160] sm:$0xf]
    %v134 = vld [vmem:[#allocation2 + $0x164] sm:$0xf]
    %v135 = vld [vmem:[#allocation2 + $0x168] sm:$0xf]
    %v136 = vld [vmem:[#allocation2 + $0x16c] sm:$0xf]
    %v137 = vld [vmem:[#allocation2 + $0x170] sm:$0xf]
    %v138 = vld [vmem:[#allocation2 + $0x174] sm:$0xf]
    %v139 = vld [vmem:[#allocation2 + $0x178] sm:$0xf]
    %v140 = vld [vmem:[#allocation2 + $0x17c] sm:$0xf]
    %v141 = vld [vmem:[#allocation2 + $0x180] sm:$0xf]
    %v142 = vld [vmem:[#allocation2 + $0x184] sm:$0xf]
    %v143 = vld [vmem:[#allocation2 + $0x188] sm:$0xf]
    %v144 = vld [vmem:[#allocation2 + $0x18c] sm:$0xf]
    %v145 = vld [vmem:[#allocation2 + $0x190] sm:$0xf]
    %v146 = vld [vmem:[#allocation2 + $0x194] sm:$0xf]
    %v147 = vld [vmem:[#allocation2 + $0x198] sm:$0xf]
    %v148 = vld [vmem:[#allocation2 + $0x19c] sm:$0xf]
    %v149 = vld [vmem:[#allocation2 + $0x1a0] sm:$0xf]
    %v150 = vld [vmem:[#allocation2 + $0x1a4] sm:$0xf]
    %v151 = vld [vmem:[#allocation2 + $0x1a8] sm:$0xf]
    %v152 = vld [vmem:[#allocation2 + $0x1ac] sm:$0xf]
    %v153 = vld [vmem:[#allocation2 + $0x1b0] sm:$0xf]
    %v154 = vld [vmem:[#allocation2 + $0x1b4] sm:$0xf]
    %v155 = vld [vmem:[#allocation2 + $0x1b8] sm:$0xf]
    %v156 = vld [vmem:[#allocation2 + $0x1bc] sm:$0xf]
    %v157 = vld [vmem:[%s2] sm:$0x1]
    %v159 = vlaneseq
    %v160 = vshrl.u32 %v159, 7
    %v161 = vsub.s32 0, %v160
    %v162 = vrot.slane %v157, %v161
    %v168 = vunpack.c.l.b16 %v41
    %v169 = vunpack.c.h.b16 %v41
    %v170 = vunpack.c.l.b16 %v42
    %v171 = vunpack.c.h.b16 %v42
    %v172 = vunpack.c.l.b16 %v43
    %v173 = vunpack.c.h.b16 %v43
    %v174 = vunpack.c.l.b16 %v44
    %v175 = vpack.c.b16 %v168, %v168
    %v176 = vpack.c.b16 %v169, %v169
    %v177 = vpack.c.b16 %v170, %v170
    %v178 = vpack.c.b16 %v171, %v171
    %v179 = vpack.c.b16 %v172, %v172
    %v180 = vpack.c.b16 %v173, %v173
    %v181 = vpack.c.b16 %v174, %v174
    %v301 = vunpack.c.l.b16 %v45
    %v302 = vunpack.c.l.b16 %v46
    %v303 = vunpack.c.l.b16 %v47
    %v304 = vunpack.c.l.b16 %v48
    %v305 = vunpack.c.l.b16 %v49
    %v306 = vunpack.c.l.b16 %v50
    %v307 = vunpack.c.l.b16 %v51
    %v308 = vunpack.c.l.b16 %v52
    %v309 = vunpack.c.l.b16 %v53
    %v310 = vunpack.c.l.b16 %v54
    %v311 = vunpack.c.l.b16 %v55
    %v312 = vunpack.c.l.b16 %v56
    %v313 = vunpack.c.l.b16 %v57
    %v314 = vunpack.c.l.b16 %v58
    %v315 = vunpack.c.l.b16 %v59
    %v316 = vunpack.c.l.b16 %v60
    %v317 = vunpack.c.l.b16 %v61
    %v318 = vunpack.c.l.b16 %v62
    %v319 = vunpack.c.l.b16 %v63
    %v320 = vunpack.c.l.b16 %v64
    %v321 = vunpack.c.l.b16 %v65
    %v322 = vunpack.c.l.b16 %v66
    %v323 = vunpack.c.l.b16 %v67
    %v324 = vunpack.c.l.b16 %v68
    %v325 = vunpack.c.l.b16 %v69
    %v326 = vunpack.c.l.b16 %v70
    %v327 = vunpack.c.l.b16 %v71
    %v328 = vunpack.c.l.b16 %v72
    %v329 = vunpack.c.l.b16 %v73
    %v330 = vunpack.c.l.b16 %v74
    %v331 = vunpack.c.l.b16 %v75
    %v332 = vunpack.c.l.b16 %v76
    %v333 = vunpack.c.l.b16 %v77
    %v334 = vunpack.c.l.b16 %v78
    %v335 = vunpack.c.l.b16 %v79
    %v336 = vunpack.c.l.b16 %v80
    %v337 = vunpack.c.l.b16 %v81
    %v338 = vunpack.c.l.b16 %v82
    %v339 = vunpack.c.l.b16 %v83
    %v340 = vunpack.c.l.b16 %v84
    %v341 = vunpack.c.l.b16 %v85
    %v342 = vunpack.c.l.b16 %v86
    %v343 = vunpack.c.l.b16 %v87
    %v344 = vunpack.c.l.b16 %v88
    %v345 = vunpack.c.l.b16 %v89
    %v346 = vunpack.c.l.b16 %v90
    %v347 = vunpack.c.l.b16 %v91
    %v348 = vunpack.c.l.b16 %v92
    %v349 = vunpack.c.l.b16 %v93
    %v350 = vunpack.c.l.b16 %v94
    %v351 = vunpack.c.l.b16 %v95
    %v352 = vunpack.c.l.b16 %v96
    %v353 = vunpack.c.l.b16 %v97
    %v354 = vunpack.c.l.b16 %v98
    %v355 = vunpack.c.l.b16 %v99
    %v356 = vunpack.c.l.b16 %v100
    %v357 = vunpack.c.l.b16 %v101
    %v358 = vunpack.c.l.b16 %v102
    %v359 = vunpack.c.l.b16 %v103
    %v360 = vunpack.c.l.b16 %v104
    %v361 = vunpack.c.l.b16 %v105
    %v362 = vunpack.c.l.b16 %v106
    %v363 = vunpack.c.l.b16 %v107
    %v364 = vunpack.c.l.b16 %v108
    %v365 = vunpack.c.l.b16 %v109
    %v366 = vunpack.c.l.b16 %v110
    %v367 = vunpack.c.l.b16 %v111
    %v368 = vunpack.c.l.b16 %v112
    %v369 = vunpack.c.l.b16 %v113
    %v370 = vunpack.c.l.b16 %v114
    %v371 = vunpack.c.l.b16 %v115
    %v372 = vunpack.c.l.b16 %v116
    %v373 = vunpack.c.l.b16 %v117
    %v374 = vunpack.c.l.b16 %v118
    %v375 = vunpack.c.l.b16 %v119
    %v376 = vunpack.c.l.b16 %v120
    %v377 = vunpack.c.l.b16 %v121
    %v378 = vunpack.c.l.b16 %v122
    %v379 = vunpack.c.l.b16 %v123
    %v380 = vunpack.c.l.b16 %v124
    %v381 = vunpack.c.l.b16 %v125
    %v382 = vunpack.c.l.b16 %v126
    %v383 = vunpack.c.l.b16 %v127
    %v384 = vunpack.c.l.b16 %v128
    %v385 = vunpack.c.l.b16 %v129
    %v386 = vunpack.c.l.b16 %v130
    %v387 = vunpack.c.l.b16 %v131
    %v388 = vunpack.c.l.b16 %v132
    %v389 = vunpack.c.l.b16 %v133
    %v390 = vunpack.c.l.b16 %v134
    %v391 = vunpack.c.l.b16 %v135
    %v392 = vunpack.c.l.b16 %v136
    %v393 = vunpack.c.l.b16 %v137
    %v394 = vunpack.c.l.b16 %v138
    %v395 = vunpack.c.l.b16 %v139
    %v396 = vunpack.c.l.b16 %v140
    %v397 = vunpack.c.l.b16 %v141
    %v398 = vunpack.c.l.b16 %v142
    %v399 = vunpack.c.l.b16 %v143
    %v400 = vunpack.c.l.b16 %v144
    %v401 = vunpack.c.l.b16 %v145
    %v402 = vunpack.c.l.b16 %v146
    %v403 = vunpack.c.l.b16 %v147
    %v404 = vunpack.c.l.b16 %v148
    %v405 = vunpack.c.l.b16 %v149
    %v406 = vunpack.c.l.b16 %v150
    %v407 = vunpack.c.l.b16 %v151
    %v408 = vunpack.c.l.b16 %v152
    %v409 = vunpack.c.l.b16 %v153
    %v410 = vunpack.c.l.b16 %v154
    %v411 = vunpack.c.l.b16 %v155
    %v412 = vunpack.c.l.b16 %v156
    %v413 = vpack.c.b16 %v302, %v301
    %v414 = vpack.c.b16 %v304, %v303
    %v415 = vpack.c.b16 %v306, %v305
    %v416 = vpack.c.b16 %v308, %v307
    %v417 = vpack.c.b16 %v310, %v309
    %v418 = vpack.c.b16 %v312, %v311
    %v419 = vpack.c.b16 %v314, %v313
    %v420 = vpack.c.b16 %v316, %v315
    %v421 = vpack.c.b16 %v318, %v317
    %v422 = vpack.c.b16 %v320, %v319
    %v423 = vpack.c.b16 %v322, %v321
    %v424 = vpack.c.b16 %v324, %v323
    %v425 = vpack.c.b16 %v326, %v325
    %v426 = vpack.c.b16 %v328, %v327
    %v427 = vpack.c.b16 %v330, %v329
    %v428 = vpack.c.b16 %v332, %v331
    %v429 = vpack.c.b16 %v334, %v333
    %v430 = vpack.c.b16 %v336, %v335
    %v431 = vpack.c.b16 %v338, %v337
    %v432 = vpack.c.b16 %v340, %v339
    %v433 = vpack.c.b16 %v342, %v341
    %v434 = vpack.c.b16 %v344, %v343
    %v435 = vpack.c.b16 %v346, %v345
    %v436 = vpack.c.b16 %v348, %v347
    %v437 = vpack.c.b16 %v350, %v349
    %v438 = vpack.c.b16 %v352, %v351
    %v439 = vpack.c.b16 %v354, %v353
    %v440 = vpack.c.b16 %v356, %v355
    %v441 = vpack.c.b16 %v358, %v357
    %v442 = vpack.c.b16 %v360, %v359
    %v443 = vpack.c.b16 %v362, %v361
    %v444 = vpack.c.b16 %v364, %v363
    %v445 = vpack.c.b16 %v366, %v365
    %v446 = vpack.c.b16 %v368, %v367
    %v447 = vpack.c.b16 %v370, %v369
    %v448 = vpack.c.b16 %v372, %v371
    %v449 = vpack.c.b16 %v374, %v373
    %v450 = vpack.c.b16 %v376, %v375
    %v451 = vpack.c.b16 %v378, %v377
    %v452 = vpack.c.b16 %v380, %v379
    %v453 = vpack.c.b16 %v382, %v381
    %v454 = vpack.c.b16 %v384, %v383
    %v455 = vpack.c.b16 %v386, %v385
    %v456 = vpack.c.b16 %v388, %v387
    %v457 = vpack.c.b16 %v390, %v389
    %v458 = vpack.c.b16 %v392, %v391
    %v459 = vpack.c.b16 %v394, %v393
    %v460 = vpack.c.b16 %v396, %v395
    %v461 = vpack.c.b16 %v398, %v397
    %v462 = vpack.c.b16 %v400, %v399
    %v463 = vpack.c.b16 %v402, %v401
    %v464 = vpack.c.b16 %v404, %v403
    %v465 = vpack.c.b16 %v406, %v405
    %v466 = vpack.c.b16 %v408, %v407
    %v467 = vpack.c.b16 %v410, %v409
    %v468 = vpack.c.b16 %v412, %v411
    %525 = vmatprep.subr.bf16.mxu0 0
    %526 = vmatpush1.bf16.msra.mxu0 %v413
    %527 = vmatprep.subr.bf16.mxu0 0
    %528 = vmatpush1.bf16.msra.mxu0 %v414
    %529 = vmatprep.subr.bf16.mxu0 0
    %530 = vmatpush1.bf16.msra.mxu0 %v415
    %531 = vmatprep.subr.bf16.mxu0 0
    %532 = vmatpush1.bf16.msra.mxu0 %v416
    %533 = vmatprep.subr.bf16.mxu0 0
    %534 = vmatpush1.bf16.msra.mxu0 %v417
    %535 = vmatprep.subr.bf16.mxu0 0
    %536 = vmatpush1.bf16.msra.mxu0 %v418
    %537 = vmatprep.subr.bf16.mxu0 0
    %538 = vmatpush1.bf16.msra.mxu0 %v419
    %539 = vmatprep.subr.bf16.mxu0 0
    %540 = vmatpush1.bf16.msra.mxu0 %v420
    %541 = vmatprep.subr.bf16.mxu0 0
    %542 = vmatpush1.bf16.msra.mxu0 %v421
    %543 = vmatprep.subr.bf16.mxu0 0
    %544 = vmatpush1.bf16.msra.mxu0 %v422
    %545 = vmatprep.subr.bf16.mxu0 0
    %546 = vmatpush1.bf16.msra.mxu0 %v423
    %547 = vmatprep.subr.bf16.mxu0 0
    %548 = vmatpush1.bf16.msra.mxu0 %v424
    %549 = vmatprep.subr.bf16.mxu0 0
    %550 = vmatpush1.bf16.msra.mxu0 %v425
    %551 = vmatprep.subr.bf16.mxu0 0
    %552 = vmatpush1.bf16.msra.mxu0 %v426
    %553 = vmatprep.subr.bf16.mxu0 0
    %554 = vmatpush1.bf16.msra.mxu0 %v427
    %555 = vmatprep.subr.bf16.mxu0 0
    %556 = vmatpush1.bf16.msra.mxu0 %v428
    %557 = vmatprep.mubr.bf16.mxu0 %v176
    %558 = vmatmul.mubr.bf16.gmra.mrb[0].mxu0 %v175
    %v559 = vpop.f32.mrb[0].mxu0
    %v560 = vadd.f32 %v162, %v559
    %v561 = vpop.f32.mrb[0].mxu0
    %v562 = vpop.f32.mrb[0].mxu0
    %v563 = vpop.f32.mrb[0].mxu0
    %564 = vdwg.mxu0
    %565 = vmatprep.subr.bf16.mxu0 0
    %566 = vmatpush1.bf16.msra.mxu0 %v429
    %567 = vmatprep.subr.bf16.mxu0 0
    %568 = vmatpush1.bf16.msra.mxu0 %v430
    %569 = vmatprep.subr.bf16.mxu0 0
    %570 = vmatpush1.bf16.msra.mxu0 %v431
    %571 = vmatprep.subr.bf16.mxu0 0
    %572 = vmatpush1.bf16.msra.mxu0 %v432
    %573 = vmatprep.subr.bf16.mxu0 0
    %574 = vmatpush1.bf16.msra.mxu0 %v433
    %575 = vmatprep.subr.bf16.mxu0 0
    %576 = vmatpush1.bf16.msra.mxu0 %v434
    %577 = vmatprep.subr.bf16.mxu0 0
    %578 = vmatpush1.bf16.msra.mxu0 %v435
    %579 = vmatprep.subr.bf16.mxu0 0
    %580 = vmatpush1.bf16.msra.mxu0 %v436
    %581 = vmatprep.subr.bf16.mxu0 0
    %582 = vmatpush1.bf16.msra.mxu0 %v437
    %583 = vmatprep.subr.bf16.mxu0 0
    %584 = vmatpush1.bf16.msra.mxu0 %v438
    %585 = vmatprep.subr.bf16.mxu0 0
    %586 = vmatpush1.bf16.msra.mxu0 %v439
    %587 = vmatprep.subr.bf16.mxu0 0
    %588 = vmatpush1.bf16.msra.mxu0 %v440
    %589 = vmatprep.subr.bf16.mxu0 0
    %590 = vmatpush1.bf16.msra.mxu0 %v441
    %591 = vmatprep.subr.bf16.mxu0 0
    %592 = vmatpush1.bf16.msra.mxu0 %v442
    %593 = vmatprep.subr.bf16.mxu0 0
    %594 = vmatpush1.bf16.msra.mxu0 %v443
    %595 = vmatprep.subr.bf16.mxu0 0
    %596 = vmatpush1.bf16.msra.mxu0 %v444
    %597 = vmatprep.mubr.bf16.mxu0 %v178
    %598 = vmatmul.mubr.bf16.gmra.mrb[0].mxu0 %v177
    %v599 = vpop.f32.mrb[0].mxu0
    %v600 = vadd.f32 %v560, %v599
    %v601 = vpop.f32.mrb[0].mxu0
    %v602 = vpop.f32.mrb[0].mxu0
    %v603 = vpop.f32.mrb[0].mxu0
    %604 = vdwg.mxu0
    %605 = vmatprep.subr.bf16.mxu0 0
    %606 = vmatpush1.bf16.msra.mxu0 %v445
    %607 = vmatprep.subr.bf16.mxu0 0
    %608 = vmatpush1.bf16.msra.mxu0 %v446
    %609 = vmatprep.subr.bf16.mxu0 0
    %610 = vmatpush1.bf16.msra.mxu0 %v447
    %611 = vmatprep.subr.bf16.mxu0 0
    %612 = vmatpush1.bf16.msra.mxu0 %v448
    %613 = vmatprep.subr.bf16.mxu0 0
    %614 = vmatpush1.bf16.msra.mxu0 %v449
    %615 = vmatprep.subr.bf16.mxu0 0
    %616 = vmatpush1.bf16.msra.mxu0 %v450
    %617 = vmatprep.subr.bf16.mxu0 0
    %618 = vmatpush1.bf16.msra.mxu0 %v451
    %619 = vmatprep.subr.bf16.mxu0 0
    %620 = vmatpush1.bf16.msra.mxu0 %v452
    %621 = vmatprep.subr.bf16.mxu0 0
    %622 = vmatpush1.bf16.msra.mxu0 %v453
    %623 = vmatprep.subr.bf16.mxu0 0
    %624 = vmatpush1.bf16.msra.mxu0 %v454
    %625 = vmatprep.subr.bf16.mxu0 0
    %626 = vmatpush1.bf16.msra.mxu0 %v455
    %627 = vmatprep.subr.bf16.mxu0 0
    %628 = vmatpush1.bf16.msra.mxu0 %v456
    %629 = vmatprep.subr.bf16.mxu0 0
    %630 = vmatpush1.bf16.msra.mxu0 %v457
    %631 = vmatprep.subr.bf16.mxu0 0
    %632 = vmatpush1.bf16.msra.mxu0 %v458
    %633 = vmatprep.subr.bf16.mxu0 0
    %634 = vmatpush1.bf16.msra.mxu0 %v459
    %635 = vmatprep.subr.bf16.mxu0 0
    %636 = vmatpush1.bf16.msra.mxu0 %v460
    %637 = vmatprep.mubr.bf16.mxu0 %v180
    %638 = vmatmul.mubr.bf16.gmra.mrb[0].mxu0 %v179
    %v639 = vpop.f32.mrb[0].mxu0
    %v640 = vadd.f32 %v600, %v639
    %v641 = vpop.f32.mrb[0].mxu0
    %v642 = vpop.f32.mrb[0].mxu0
    %v643 = vpop.f32.mrb[0].mxu0
    %644 = vdwg.mxu0
    %645 = vmatprep.subr.bf16.mxu0 0
    %646 = vmatpush1.bf16.msra.mxu0 %v461
    %647 = vmatprep.subr.bf16.mxu0 0
    %648 = vmatpush1.bf16.msra.mxu0 %v462
    %649 = vmatprep.subr.bf16.mxu0 0
    %650 = vmatpush1.bf16.msra.mxu0 %v463
    %651 = vmatprep.subr.bf16.mxu0 0
    %652 = vmatpush1.bf16.msra.mxu0 %v464
    %653 = vmatprep.subr.bf16.mxu0 0
    %654 = vmatpush1.bf16.msra.mxu0 %v465
    %655 = vmatprep.subr.bf16.mxu0 0
    %656 = vmatpush1.bf16.msra.mxu0 %v466
    %657 = vmatprep.subr.bf16.mxu0 0
    %658 = vmatpush1.bf16.msra.mxu0 %v467
    %659 = vmatprep.subr.bf16.mxu0 0
    %660 = vmatpush1.bf16.msra.mxu0 %v468
    %661 = vmatprep.subr.bf16.mxu0 0
    %662 = vmatpush1.bf16.msra.mxu0 0
    %663 = vmatprep.subr.bf16.mxu0 0
    %664 = vmatpush1.bf16.msra.mxu0 0
    %665 = vmatprep.subr.bf16.mxu0 0
    %666 = vmatpush1.bf16.msra.mxu0 0
    %667 = vmatprep.subr.bf16.mxu0 0
    %668 = vmatpush1.bf16.msra.mxu0 0
    %669 = vmatprep.subr.bf16.mxu0 0
    %670 = vmatpush1.bf16.msra.mxu0 0
    %671 = vmatprep.subr.bf16.mxu0 0
    %672 = vmatpush1.bf16.msra.mxu0 0
    %673 = vmatprep.subr.bf16.mxu0 0
    %674 = vmatpush1.bf16.msra.mxu0 0
    %675 = vmatprep.subr.bf16.mxu0 0
    %676 = vmatpush1.bf16.msra.mxu0 0
    %677 = vmatprep.mubr.bf16.mxu0 0
    %678 = vmatmul.mubr.bf16.gmra.mrb[0].mxu0 %v181
    %v679 = vpop.f32.mrb[0].mxu0
    %v680 = vadd.f32 %v640, %v679
    %v681 = vpop.f32.mrb[0].mxu0
    %v682 = vpop.f32.mrb[0].mxu0
    %v683 = vpop.f32.mrb[0].mxu0
    %684 = vdwg.mxu0
    %v685 = vmax.f32 %v680, 0.0
    %v686 = vpack.c.bf16 %v685, %v685
    %v687 = vld [vmem:[%s3] sm:$0xf]
    %v688 = vld [vmem:[%s3 + $0x4] sm:$0xf]
    %v689 = vld [vmem:[%s3 + $0x8] sm:$0xf]
    %v690 = vld [vmem:[%s3 + $0xc] sm:$0xf]
    %v691 = vld [vmem:[%s3 + $0x10] sm:$0xf]
    %v692 = vld [vmem:[%s3 + $0x14] sm:$0xf]
    %v693 = vld [vmem:[%s3 + $0x18] sm:$0xf]
    %v694 = vld [vmem:[%s3 + $0x1c] sm:$0xf]
    %v695 = vld [vmem:[%s3 + $0x20] sm:$0xf]
    %v696 = vld [vmem:[%s3 + $0x24] sm:$0xf]
    %v697 = vld [vmem:[%s3 + $0x28] sm:$0xf]
    %v698 = vld [vmem:[%s3 + $0x2c] sm:$0xf]
    %v699 = vld [vmem:[%s3 + $0x30] sm:$0xf]
    %v700 = vld [vmem:[%s3 + $0x34] sm:$0xf]
    %v701 = vld [vmem:[%s3 + $0x38] sm:$0xf]
    %v702 = vld [vmem:[%s3 + $0x3c] sm:$0xf]
    %v703 = vld [vmem:[%s4] sm:$0x1]
    %v705 = vlaneseq
    %v706 = vshrl.u32 %v705, 7
    %v707 = vsub.s32 0, %v706
    %v708 = vrot.slane %v703, %v707
    %v726 = vunpack.c.l.b16 %v687
    %v727 = vunpack.c.l.b16 %v688
    %v728 = vunpack.c.l.b16 %v689
    %v729 = vunpack.c.l.b16 %v690
    %v730 = vunpack.c.l.b16 %v691
    %v731 = vunpack.c.l.b16 %v692
    %v732 = vunpack.c.l.b16 %v693
    %v733 = vunpack.c.l.b16 %v694
    %v734 = vunpack.c.l.b16 %v695
    %v735 = vunpack.c.l.b16 %v696
    %v736 = vunpack.c.l.b16 %v697
    %v737 = vunpack.c.l.b16 %v698
    %v738 = vunpack.c.l.b16 %v699
    %v739 = vunpack.c.l.b16 %v700
    %v740 = vunpack.c.l.b16 %v701
    %v741 = vunpack.c.l.b16 %v702
    %v742 = vpack.c.b16 %v727, %v726
    %v743 = vpack.c.b16 %v729, %v728
    %v744 = vpack.c.b16 %v731, %v730
    %v745 = vpack.c.b16 %v733, %v732
    %v746 = vpack.c.b16 %v735, %v734
    %v747 = vpack.c.b16 %v737, %v736
    %v748 = vpack.c.b16 %v739, %v738
    %v749 = vpack.c.b16 %v741, %v740
    %758 = vmatprep.subr.bf16.mxu0 0
    %759 = vmatpush1.bf16.msra.mxu0 %v742
    %760 = vmatprep.subr.bf16.mxu0 0
    %761 = vmatpush1.bf16.msra.mxu0 %v743
    %762 = vmatprep.subr.bf16.mxu0 0
    %763 = vmatpush1.bf16.msra.mxu0 %v744
    %764 = vmatprep.subr.bf16.mxu0 0
    %765 = vmatpush1.bf16.msra.mxu0 %v745
    %766 = vmatprep.subr.bf16.mxu0 0
    %767 = vmatpush1.bf16.msra.mxu0 %v746
    %768 = vmatprep.subr.bf16.mxu0 0
    %769 = vmatpush1.bf16.msra.mxu0 %v747
    %770 = vmatprep.subr.bf16.mxu0 0
    %771 = vmatpush1.bf16.msra.mxu0 %v748
    %772 = vmatprep.subr.bf16.mxu0 0
    %773 = vmatpush1.bf16.msra.mxu0 %v749
    %774 = vmatprep.subr.bf16.mxu0 0
    %775 = vmatpush1.bf16.msra.mxu0 0
    %776 = vmatprep.subr.bf16.mxu0 0
    %777 = vmatpush1.bf16.msra.mxu0 0
    %778 = vmatprep.subr.bf16.mxu0 0
    %779 = vmatpush1.bf16.msra.mxu0 0
    %780 = vmatprep.subr.bf16.mxu0 0
    %781 = vmatpush1.bf16.msra.mxu0 0
    %782 = vmatprep.subr.bf16.mxu0 0
    %783 = vmatpush1.bf16.msra.mxu0 0
    %784 = vmatprep.subr.bf16.mxu0 0
    %785 = vmatpush1.bf16.msra.mxu0 0
    %786 = vmatprep.subr.bf16.mxu0 0
    %787 = vmatpush1.bf16.msra.mxu0 0
    %788 = vmatprep.subr.bf16.mxu0 0
    %789 = vmatpush1.bf16.msra.mxu0 0
    %790 = vmatprep.mubr.bf16.mxu0 0
    %791 = vmatmul.mubr.bf16.gmra.mrb[0].mxu0 %v686
    %v792 = vpop.f32.mrb[0].mxu0
    %v793 = vadd.f32 %v708, %v792
    %v794 = vpop.f32.mrb[0].mxu0
    %v795 = vpop.f32.mrb[0].mxu0
    %v796 = vpop.f32.mrb[0].mxu0
    %797 = vdwg.mxu0
    %v798 = vmax.f32 %v793, 0.0
    %v799 = vpack.c.bf16 %v798, %v798
    %v800 = vld [vmem:[%s5] sm:$0xf]
    %v801 = vld [vmem:[%s5 + $0x4] sm:$0xf]
    %v802 = vld [vmem:[%s5 + $0x8] sm:$0xf]
    %v803 = vld [vmem:[%s5 + $0xc] sm:$0xf]
    %v804 = vld [vmem:[%s5 + $0x10] sm:$0xf]
    %v805 = vld [vmem:[%s5 + $0x14] sm:$0xf]
    %v806 = vld [vmem:[%s5 + $0x18] sm:$0xf]
    %v807 = vld [vmem:[%s5 + $0x1c] sm:$0xf]
    %v808 = vld [vmem:[%s5 + $0x20] sm:$0xf]
    %v809 = vld [vmem:[%s5 + $0x24] sm:$0xf]
    %v810 = vld [vmem:[%s5 + $0x28] sm:$0xf]
    %v811 = vld [vmem:[%s5 + $0x2c] sm:$0xf]
    %v812 = vld [vmem:[%s5 + $0x30] sm:$0xf]
    %v813 = vld [vmem:[%s5 + $0x34] sm:$0xf]
    %v814 = vld [vmem:[%s5 + $0x38] sm:$0xf]
    %v815 = vld [vmem:[%s5 + $0x3c] sm:$0xf]
    %v816 = vld [vmem:[%s6] sm:$0x1]
    %v818 = vlaneseq
    %v819 = vshrl.u32 %v818, 7
    %v820 = vsub.s32 0, %v819
    %v821 = vrot.slane %v816, %v820
    %v839 = vunpack.c.l.b16 %v800
    %v840 = vunpack.c.l.b16 %v801
    %v841 = vunpack.c.l.b16 %v802
    %v842 = vunpack.c.l.b16 %v803
    %v843 = vunpack.c.l.b16 %v804
    %v844 = vunpack.c.l.b16 %v805
    %v845 = vunpack.c.l.b16 %v806
    %v846 = vunpack.c.l.b16 %v807
    %v847 = vunpack.c.l.b16 %v808
    %v848 = vunpack.c.l.b16 %v809
    %v849 = vunpack.c.l.b16 %v810
    %v850 = vunpack.c.l.b16 %v811
    %v851 = vunpack.c.l.b16 %v812
    %v852 = vunpack.c.l.b16 %v813
    %v853 = vunpack.c.l.b16 %v814
    %v854 = vunpack.c.l.b16 %v815
    %v855 = vpack.c.b16 %v840, %v839
    %v856 = vpack.c.b16 %v842, %v841
    %v857 = vpack.c.b16 %v844, %v843
    %v858 = vpack.c.b16 %v846, %v845
    %v859 = vpack.c.b16 %v848, %v847
    %v860 = vpack.c.b16 %v850, %v849
    %v861 = vpack.c.b16 %v852, %v851
    %v862 = vpack.c.b16 %v854, %v853
    %871 = vmatprep.subr.bf16.mxu0 0
    %872 = vmatpush1.bf16.msra.mxu0 %v855
    %873 = vmatprep.subr.bf16.mxu0 0
    %874 = vmatpush1.bf16.msra.mxu0 %v856
    %875 = vmatprep.subr.bf16.mxu0 0
    %876 = vmatpush1.bf16.msra.mxu0 %v857
    %877 = vmatprep.subr.bf16.mxu0 0
    %878 = vmatpush1.bf16.msra.mxu0 %v858
    %879 = vmatprep.subr.bf16.mxu0 0
    %880 = vmatpush1.bf16.msra.mxu0 %v859
    %881 = vmatprep.subr.bf16.mxu0 0
    %882 = vmatpush1.bf16.msra.mxu0 %v860
    %883 = vmatprep.subr.bf16.mxu0 0
    %884 = vmatpush1.bf16.msra.mxu0 %v861
    %885 = vmatprep.subr.bf16.mxu0 0
    %886 = vmatpush1.bf16.msra.mxu0 %v862
    %887 = vmatprep.subr.bf16.mxu0 0
    %888 = vmatpush1.bf16.msra.mxu0 0
    %889 = vmatprep.subr.bf16.mxu0 0
    %890 = vmatpush1.bf16.msra.mxu0 0
    %891 = vmatprep.subr.bf16.mxu0 0
    %892 = vmatpush1.bf16.msra.mxu0 0
    %893 = vmatprep.subr.bf16.mxu0 0
    %894 = vmatpush1.bf16.msra.mxu0 0
    %895 = vmatprep.subr.bf16.mxu0 0
    %896 = vmatpush1.bf16.msra.mxu0 0
    %897 = vmatprep.subr.bf16.mxu0 0
    %898 = vmatpush1.bf16.msra.mxu0 0
    %899 = vmatprep.subr.bf16.mxu0 0
    %900 = vmatpush1.bf16.msra.mxu0 0
    %901 = vmatprep.subr.bf16.mxu0 0
    %902 = vmatpush1.bf16.msra.mxu0 0
    %903 = vmatprep.mubr.bf16.mxu0 0
    %904 = vmatmul.mubr.bf16.gmra.mrb[0].mxu0 %v799
    %v905 = vpop.f32.mrb[0].mxu0
    %v906 = vadd.f32 %v821, %v905
    %v907 = vpop.f32.mrb[0].mxu0
    %v908 = vpop.f32.mrb[0].mxu0
    %v909 = vpop.f32.mrb[0].mxu0
    %910 = vdwg.mxu0
    %911 = vst [vmem:[%s7] sm:$0xff] %v906
    // Predicated region
    $region34: #{mnist_ann_forward.1} parent=1 // pred_check
      _
    $region35: #{mnist_ann_forward.1} parent=1 // pred_check_branch
      %913 = sbr.rel (0) target = $region37
    $region36: #{mnist_ann_forward.1} parent=1 // pred_region
      _
    $region37: #{mnist_ann_forward.1} parent=1 // pred_fallthru
      _
    // Predicated region
    $region38: #{mnist_ann_forward.1} parent=1 // pred_check
      _
    $region39: #{mnist_ann_forward.1} parent=1 // pred_check_branch
      %915 = sbr.rel (0) target = $region41
    $region40: #{mnist_ann_forward.1} parent=1 // pred_region
      _
    $region41: #{mnist_ann_forward.1} parent=1 // pred_fallthru
      _
    %916 = vsyncpa [#allocation3], 1

</llo_original>
